<compile_context>
chip_gen: v7x
topology: tpu7x:2x2x1
jax: 0.10.0
libtpu: 0.0.40
codegen_flags: <defaults>
</compile_context>

<pallas_src>
import math
from functools import partial

import numpy as np
import jax
import jax.numpy as jnp
from jax import lax
from jax.experimental import pallas as pl
from jax.experimental.pallas import tpu as pltpu


# ----------------------------- helpers --------------------------------------


def _round_up(a: int, b: int) -> int:
    return (a + b - 1) // b * b


def _vmem_budget_bytes() -> int:
    try:
        phys = int(pltpu.get_tpu_info().vmem_capacity_bytes)
    except Exception:
        phys = 64 * 1024 * 1024  # conservative (v7x per-core VMEM)
    return min((phys * 3) // 4, 112 * 1024 * 1024)


def _pick_tm(n: int, d_pad: int, itemsize: int, budget_bytes: int) -> int:
    """Row tile: multiple of 8, capped at 256, floored at 128 (never starve the
    MXU M-dim).  The resident key is single-buffered, the q tile double-buffered."""
    tm = min(256, _round_up(n, 8))
    tm_floor = min(128, tm)
    while True:
        n_pad = _round_up(n, tm)
        need = (2 * tm * d_pad * itemsize      # streamed q tile (double-buffered)
                + n_pad * d_pad * itemsize     # resident key (single-buffered scratch)
                + 4 * tm * n_pad * 4           # f32 logits tile + elementwise temps
                + 4 * n_pad * 4)               # col bias / col sums
        if need <= budget_bytes or tm <= tm_floor:
            return tm
        tm = max(tm_floor, _round_up(tm // 2, 8))


# ----------------------------- kernels --------------------------------------


def _l2norm_kernel(x_ref, o_ref):
    # F.normalize(x, dim=1): x / max(||x||, 1e-12)  ==  x * rsqrt(max(||x||^2, 1e-24))
    x = x_ref[...].astype(jnp.float32)
    s = jnp.sum(x * x, axis=1, keepdims=True)
    inv = lax.rsqrt(jnp.maximum(s, 1e-24))
    o_ref[...] = (x * inv).astype(o_ref.dtype)


def _arcface_fused_kernel(q_ref, k_hbm_ref, colb_ref,
                          rowsum_ref, diagsum_ref, colsum_ref,
                          k_vmem, k_sem,
                          *, t_inv, margin, old, n_true, tm, shift, pad):
    cos_m = math.cos(margin)
    sin_m = math.sin(margin)
    threshold = math.cos(math.pi - margin)
    sinmm = math.sin(math.pi - margin) * margin

    i = pl.program_id(0)
    row0 = pl.multiple_of(i * tm, tm)

    @pl.when(i == 0)
    def _init():
        # Single-buffered key residency: one DMA into scratch, reused by every
        # grid step (no double-buffered constant-index BlockSpec copy).
        cp = pltpu.make_async_copy(k_hbm_ref, k_vmem, k_sem)
        cp.start()
        cp.wait()
        rowsum_ref[...] = jnp.zeros_like(rowsum_ref)
        diagsum_ref[...] = jnp.zeros_like(diagsum_ref)
        colsum_ref[...] = jnp.zeros_like(colsum_ref)

    q = q_ref[...]                          # (tm, d_pad), pre-normalized
    k = k_vmem[...]                         # (n_pad, d_pad), pre-normalized, resident
    n_pad = k.shape[0]

    # Cosine-similarity tile on the MXU; contract the feature dim of both
    # operands directly (no materialized transpose).
    logits = lax.dot_general(q, k, (((1,), (1,)), ((), ())),
                             preferred_element_type=jnp.float32)   # (tm, n_pad)
    logits = jnp.clip(logits, -1.0, 1.0)

    # Diagonal cosines of this row tile (O(tm*D)); margin transcendentals on a
    # (tm, 1) f32 vector only.
    qf = q.astype(jnp.float32)
    kdf = k_vmem[pl.ds(row0, tm), :].astype(jnp.float32)
    cos_d = jnp.clip(jnp.sum(qf * kdf, axis=1, keepdims=True), -1.0, 1.0)
    sin_d = jnp.sqrt(jnp.maximum(1.0 - cos_d * cos_d, 0.0))
    cos_dm = cos_d * cos_m - sin_d * sin_m
    if old:
        new_d = jnp.where(cos_d > threshold, cos_dm, cos_d - sinmm)
    else:
        # cos(arccos(x) + m) == x*cos(m) - sqrt(1-x^2)*sin(m) exactly on [-1, 1]
        new_d = cos_dm
    diag_scaled = new_d * t_inv             # (tm, 1)

    # Splat the margin-adjusted diagonal: ONE iota, compared against a (tm, 1)
    # row-id vector (no second full-tile int32 iota).
    cols = lax.broadcasted_iota(jnp.int32, (tm, n_pad), 1)
    row_ids = row0 + lax.broadcasted_iota(jnp.int32, (tm, 1), 0)
    logits = jnp.where(cols == row_ids, new_d, logits)

    # Scale and apply the additive column bias (folds the global LSE shift -S
    # and the padded-column mask in one add); pad rows masked with a (tm, 1)
    # additive bias.  One exp pass feeds both reductions.
    # NOTE: the global shift is exact-enough while 2/temp < ~85 (f32 exp range).
    scaled = logits * t_inv + colb_ref[...]
    if pad:
        rvalid = row_ids < n_true
        scaled = scaled + jnp.where(rvalid, 0.0, -1e30)
    e = jnp.exp(scaled)                     # (tm, n_pad)

    lse_row = jnp.log(jnp.sum(e, axis=1, keepdims=True)) + shift       # (tm, 1)
    per_row = lse_row - diag_scaled
    if pad:
        per_row = jnp.where(rvalid, per_row, 0.0)
        diag_scaled = jnp.where(rvalid, diag_scaled, 0.0)

    rowsum_ref[...] += jnp.sum(per_row, axis=0, keepdims=True)          # (1, 1)
    diagsum_ref[...] += jnp.sum(diag_scaled, axis=0, keepdims=True)     # (1, 1)
    colsum_ref[...] += jnp.sum(e, axis=0, keepdims=True)                # (1, n_pad)


# ----------------------------- wrappers -------------------------------------


def _l2_normalize(xp, *, tm, out_dtype, vmem_limit):
    n_pad, d_pad = xp.shape
    num_tiles = n_pad // tm
    return pl.pallas_call(
        _l2norm_kernel,
        out_shape=jax.ShapeDtypeStruct((n_pad, d_pad), out_dtype),
        grid_spec=pltpu.PrefetchScalarGridSpec(
            num_scalar_prefetch=0,
            grid=(num_tiles,),
            in_specs=[pl.BlockSpec((tm, d_pad), lambda i: (i, 0))],
            out_specs=pl.BlockSpec((tm, d_pad), lambda i: (i, 0)),
        ),
        compiler_params=pltpu.CompilerParams(
            dimension_semantics=("parallel",),
            vmem_limit_bytes=int(vmem_limit)),
    )(xp)


def _arcface_fused(qn, kn, col_bias, *, t_inv, margin, old, n_true, tm, shift,
                   vmem_limit):
    """One sweep producing sum_i(lse_row_i - diag_i), sum_i(diag_i), col exp sums."""
    n_pad, d_pad = qn.shape
    num_tiles = n_pad // tm
    pad = n_pad != n_true
    itemsize = int(jnp.dtype(qn.dtype).itemsize)
    kernel = partial(_arcface_fused_kernel, t_inv=t_inv, margin=margin, old=old,
                     n_true=n_true, tm=tm, shift=shift, pad=pad)
    cost = pl.CostEstimate(
        flops=int(2 * n_pad * n_pad * d_pad + 2 * n_pad * d_pad
                  + 10 * n_pad * n_pad),
        transcendentals=int(n_pad * n_pad + 4 * n_pad),
        bytes_accessed=int(2 * n_pad * d_pad * itemsize + n_pad * 8 + 16),
    )
    return pl.pallas_call(
        kernel,
        out_shape=(jax.ShapeDtypeStruct((1, 1), jnp.float32),
                   jax.ShapeDtypeStruct((1, 1), jnp.float32),
                   jax.ShapeDtypeStruct((1, n_pad), jnp.float32)),
        grid_spec=pltpu.PrefetchScalarGridSpec(
            num_scalar_prefetch=0,
            grid=(num_tiles,),
            in_specs=[
                pl.BlockSpec((tm, d_pad), lambda i: (i, 0)),   # streamed q rows
                pl.BlockSpec(memory_space=pl.ANY),             # keys stay in HBM
                pl.BlockSpec((1, n_pad), lambda i: (0, 0)),    # col bias (tiny)
            ],
            out_specs=[
                pl.BlockSpec((1, 1), lambda i: (0, 0)),
                pl.BlockSpec((1, 1), lambda i: (0, 0)),
                pl.BlockSpec((1, n_pad), lambda i: (0, 0)),
            ],
            scratch_shapes=[
                pltpu.VMEM((n_pad, d_pad), qn.dtype),          # single-buffered key
                pltpu.SemaphoreType.DMA,
            ]),
        compiler_params=pltpu.CompilerParams(
            dimension_semantics=("arbitrary",),   # column/scalar accumulators carry
            vmem_limit_bytes=int(vmem_limit)),
        cost_estimate=cost,
    )(qn, kn, col_bias)


def arcface_loss(x1, x2, *, temp, margin, old, two_way=True, mxu_dtype=None):
    # TODO(synk): pos_mat != None and soft_label paths are not implemented.
    assert margin < 0.5 * math.pi
    n, d = x1.shape
    assert x2.shape == (n, d)

    budget = _vmem_budget_bytes()
    if mxu_dtype is None:
        # bf16 embeddings stay bf16 into the MXU; f32 inputs default to f32
        # (pass mxu_dtype=jnp.bfloat16 for the bf16-native-MXU fast path).
        mxu_dtype = jnp.bfloat16 if x1.dtype == jnp.bfloat16 else jnp.float32
    itemsize = int(jnp.dtype(mxu_dtype).itemsize)

    d_pad = _round_up(d, 128)
    tm = _pick_tm(n, d_pad, itemsize, budget)
    n_pad = _round_up(n, tm)

    if n_pad * d_pad * itemsize > budget:
        # TODO(synk): N (column) tiling with online row-LSE for non-resident keys.
        raise NotImplementedError(
            "key matrix does not fit in VMEM; column tiling not implemented")

    def prep(x):
        # Pad in the INPUT dtype (no padded f32 HBM copy for bf16 inputs);
        # the l2norm kernel casts to f32 internally.
        return jnp.pad(x, ((0, n_pad - n), (0, d_pad - d)))

    x1n = _l2_normalize(prep(x1), tm=tm, out_dtype=mxu_dtype, vmem_limit=budget)
    x2n = _l2_normalize(prep(x2), tm=tm, out_dtype=mxu_dtype, vmem_limit=budget)

    t_inv = 1.0 / temp
    shift = t_inv  # global LSE shift: |clamped logits * t_inv| <= t_inv
    col_bias = jnp.where(jnp.arange(n_pad) < n, -shift, -1e30)
    col_bias = col_bias.astype(jnp.float32).reshape(1, n_pad)

    row_sum, diag_sum, col_sums = _arcface_fused(
        x1n, x2n, col_bias, t_inv=t_inv, margin=margin, old=old,
        n_true=n, tm=tm, shift=shift, vmem_limit=budget)

    row_term = row_sum[0, 0]                       # sum_i (lse_row_i - diag_i)
    if not two_way:
        return row_term / n

    valid = jnp.arange(n_pad) < n
    safe = jnp.where(valid, col_sums[0], 1.0)
    lse_col = jnp.log(safe) + shift
    col_term = jnp.sum(jnp.where(valid, lse_col, 0.0)) - diag_sum[0, 0]
    return 0.5 * (row_term + col_term) / n


# ----------------------------- reference ------------------------------------


def arcface_ref(x1, x2, *, temp, margin, old):
    """Pure-JAX reference mirroring the PyTorch module (pos_mat=None, two_way)."""
    t_inv = 1.0 / temp
    cos_m, sin_m = math.cos(margin), math.sin(margin)
    threshold = math.cos(math.pi - margin)
    sinmm = math.sin(math.pi - margin) * margin

    def normalize(x):
        nrm = jnp.linalg.norm(x, axis=1, keepdims=True)
        return x / jnp.maximum(nrm, 1e-12)

    logits = jnp.clip(normalize(x1) @ normalize(x2).T, -1.0, 1.0)
    n = logits.shape[0]
    cos_theta = jnp.diag(logits)
    if old:
        sin_theta = jnp.sqrt(jnp.maximum(1.0 - cos_theta ** 2, 0.0))
        cos_theta_m = cos_theta * cos_m - sin_theta * sin_m
        new_vals = jnp.where(cos_theta > threshold, cos_theta_m, cos_theta - sinmm)
    else:
        new_vals = jnp.cos(jnp.arccos(cos_theta) + margin)
    logits = logits.at[jnp.arange(n), jnp.arange(n)].set(new_vals) * t_inv

    def ce(lg):
        lse = jax.scipy.special.logsumexp(lg, axis=1)
        return jnp.mean(lse - jnp.diag(lg))

    return 0.5 * (ce(logits) + ce(logits.T))


# ----------------------------- main -----------------------------------------


if __name__ == "__main__":
    key = jax.random.PRNGKey(0)
    k1, k2, k3, k4, k5, k6 = jax.random.split(key, 6)

    temp, margin = 0.1, 0.4

    # Case 1: small aligned batch, both margin variants, f32 MXU path.
    N, D = 8, 32
    x1 = jax.random.normal(k1, (N, D), dtype=jnp.float32)
    x2 = jax.random.normal(k2, (N, D), dtype=jnp.float32)
    for old in (True, False):
        loss = arcface_loss(x1, x2, temp=temp, margin=margin, old=old)
        jax.block_until_ready(loss)
        ref = arcface_ref(x1, x2, temp=temp, margin=margin, old=old)
        np.testing.assert_allclose(np.asarray(loss), np.asarray(ref),
                                   rtol=1e-4, atol=1e-5)

    # Case 2: unaligned N / D exercises the padding + masking path.
    N2, D2 = 13, 48
    y1 = jax.random.normal(k3, (N2, D2), dtype=jnp.float32)
    y2 = jax.random.normal(k4, (N2, D2), dtype=jnp.float32)
    loss = arcface_loss(y1, y2, temp=temp, margin=margin, old=True)
    jax.block_until_ready(loss)
    ref = arcface_ref(y1, y2, temp=temp, margin=margin, old=True)
    np.testing.assert_allclose(np.asarray(loss), np.asarray(ref),
                               rtol=1e-4, atol=1e-5)

    # Case 3: bf16 MXU operands (v6e/v7x fast path), looser tolerance vs f32 ref.
    N3, D3 = 16, 64
    z1 = jax.random.normal(k5, (N3, D3), dtype=jnp.float32)
    z2 = jax.random.normal(k6, (N3, D3), dtype=jnp.float32)
    loss = arcface_loss(z1, z2, temp=temp, margin=margin, old=False,
                        mxu_dtype=jnp.bfloat16)
    jax.block_until_ready(loss)
    ref = arcface_ref(z1, z2, temp=temp, margin=margin, old=False)
    np.testing.assert_allclose(np.asarray(loss), np.asarray(ref),
                               rtol=5e-2, atol=5e-2)

    print("KERNEL_OK")
</pallas_src>

<mosaic_0001>
module attributes {stable_mosaic.version = 11 : i64} {
  func.func @_l2norm_kernel(%arg0: i32, %arg1: memref<8x128xf32, #tpu.memory_space<vmem>>, %arg2: memref<8x128xf32, #tpu.memory_space<vmem>>) attributes {dimension_semantics = [#tpu.dimension_semantics<parallel>], iteration_bounds = array<i64: 1>, scalar_prefetch = 0 : i64, scratch_operands = 0 : i64, tpu.core_type = #tpu.core_type<tc>, window_params = [{transform_indices = @transform_0, window_bounds = array<i64: 8, 128>}, {transform_indices = @transform_1, window_bounds = array<i64: 8, 128>}]} {
    %c0 = arith.constant 0 : index
    %c0_0 = arith.constant 0 : index
    %0 = vector.load %arg1[%c0, %c0_0] : memref<8x128xf32, #tpu.memory_space<vmem>>, vector<8x128xf32>
    %1 = arith.mulf %0, %0 : vector<8x128xf32>
    %cst = arith.constant dense<0.000000e+00> : vector<8xf32>
    %2 = vector.multi_reduction <add>, %1, %cst [1] : vector<8x128xf32> to vector<8xf32>
    %3 = vector.shape_cast %2 : vector<8xf32> to vector<8x1xf32>
    %cst_1 = arith.constant 1.000000e-24 : f32
    %4 = vector.broadcast %cst_1 : f32 to vector<8x1xf32>
    %5 = arith.maximumf %3, %4 : vector<8x1xf32>
    %6 = math.rsqrt %5 : vector<8x1xf32>
    %7 = vector.broadcast %6 : vector<8x1xf32> to vector<8x128xf32>
    %8 = arith.mulf %0, %7 : vector<8x128xf32>
    %c0_2 = arith.constant 0 : index
    %c0_3 = arith.constant 0 : index
    %9 = vector.load %arg2[%c0_2, %c0_3] : memref<8x128xf32, #tpu.memory_space<vmem>>, vector<8x128xf32>
    tpu.vector_store %arg2[%c0_2, %c0_3], %8 {strides = array<i32>} : memref<8x128xf32, #tpu.memory_space<vmem>>, vector<8x128xf32>,
    return
  }
  func.func @transform_0(%arg0: i32) -> (i32, i32) {
    %c0_i32 = arith.constant 0 : i32
    %c0_i32_0 = arith.constant 0 : i32
    return %arg0, %c0_i32 : i32, i32
  }
  func.func @transform_1(%arg0: i32) -> (i32, i32) {
    %c0_i32 = arith.constant 0 : i32
    %c0_i32_0 = arith.constant 0 : i32
    return %arg0, %c0_i32 : i32, i32
  }
}

</mosaic_0001>

<llo_original>
// kernel: tpu_custom_call.1
$region0: #{tpu_custom_call.1}
  #allocation0 [shape = 'u32[]', space=smem, size = 0x4, offset = 0x4, fixed_abs, tag = 'smem constant byte address 0x4 - core index']
  #allocation1 [shape = 'u32[144,128]{1,0:T(1,128)}', space=vmem, size = 0x12000, scoped, tag = 'internal scratch']
  %s0 = inlined_call_operand.hbm [shape: f32[8,128], index: 0, kind: input, shape index: {}]
  %s1 = inlined_call_operand.hbm [shape: f32[8,128], index: 1, kind: output, shape index: {}]
  %s2 = sld [smem:[#allocation0]]
  $region18: #{tpu_custom_call.1} parent=0
    _
  %s4 = ssub.s32 1, %s2
  %s5 = scalar_select 0, %s4, %s2
  $region1: #{tpu_custom_call.1} parent=0
    #allocation2 [shape = 'u8[4096]{0}', space=vmem, size = 0x1000, scoped, tag = 'input window, operand 0, single buffered']
    #allocation3 [shape = 's32[1]{0}', space=sflag, size = 0x4, scoped, tag = 'scoped memory for tpu_custom_call.1']
    #allocation4 [shape = 's32[1]{0}', space=sflag, size = 0x4, scoped, tag = 'scoped memory for tpu_custom_call.1']
    #allocation5 [shape = 'u8[4096]{0}', space=vmem, size = 0x1000, scoped, tag = 'output window, operand 0, single buffered']
    %6 = vsyncpa [#allocation3], 0
    %7 = vsyncpa [#allocation4], 0
    // Predicated region
    $region2: #{tpu_custom_call.1} parent=1 // pred_check
      _
    $region3: #{tpu_custom_call.1} parent=1 // pred_check_branch
      %9 = sbr.rel (0) target = $region5
    $region4: #{tpu_custom_call.1} parent=1 // pred_region
      %s11 = ssub.s32 128, 128
      %12 = vsyncadd [#allocation3], %s11
      %s14 = sshll.u32 [#allocation2], 4
      %s15 = int_to_ptr.vmem [resolvable:$true] %s14
      %17 = dma.hbm_to_vmem [thread:$0]  %s0, 128, %s15, [#allocation3]
    $region5: #{tpu_custom_call.1} parent=1 // pred_fallthru
      _
    // Predicated region
    $region6: #{tpu_custom_call.1} parent=1 // pred_check
      _
    $region7: #{tpu_custom_call.1} parent=1 // pred_check_branch
      %19 = sbr.rel (0) target = $region9
    $region8: #{tpu_custom_call.1} parent=1 // pred_region
      %20 = dma.done [#allocation3], 128
    $region9: #{tpu_custom_call.1} parent=1 // pred_fallthru
      _
    %v21 = vld [vmem:[#allocation2] sm:$0xff]
    %v22 = vmul.f32 %v21, %v21
    %23 = vadd.xlane.f32.xlu0 %v22
    %v24 = vpop.xlane.xlu0 %23
    %v25 = vmax.f32 %v24, 1e-24
    %v26 = vrsqrt.pop %v25
    %v27 = vmul.f32 %v21, %v26
    %28 = vst [vmem:[#allocation5] sm:$0xff] %v27
    // Predicated region
    $region10: #{tpu_custom_call.1} parent=1 // pred_check
      _
    $region11: #{tpu_custom_call.1} parent=1 // pred_check_branch
      %30 = sbr.rel (0) target = $region13
    $region12: #{tpu_custom_call.1} parent=1 // pred_region
      %s32 = ssub.s32 128, 128
      %33 = vsyncadd [#allocation4], %s32
      %s35 = sshll.u32 [#allocation5], 4
      %s36 = int_to_ptr.vmem [resolvable:$true] %s35
      %38 = dma.vmem_to_hbm [thread:$0]  %s36, 128, %s1, [#allocation4]
    $region13: #{tpu_custom_call.1} parent=1 // pred_fallthru
      _
    // Predicated region
    $region14: #{tpu_custom_call.1} parent=1 // pred_check
      _
    $region15: #{tpu_custom_call.1} parent=1 // pred_check_branch
      %40 = sbr.rel (0) target = $region17
    $region16: #{tpu_custom_call.1} parent=1 // pred_region
      %41 = dma.done [#allocation4], 128
    $region17: #{tpu_custom_call.1} parent=1 // pred_fallthru
      _
    %42 = vsyncpa [#allocation3], 1
    %43 = vsyncpa [#allocation4], 1

</llo_original>
